<compile_context>
chip_gen: v6e
topology: v6e:2x2x1
jax: 0.10.0
libtpu: 0.0.40
codegen_flags: <defaults>
</compile_context>

<pallas_src>
import jax
import jax.numpy as jnp
from jax.experimental import pallas as pl
from jax.experimental.pallas import tpu as pltpu

LANES = 128


def _elementwise_kernel(x_ref, add_ref, sub_ref, mul_ref, div_ref, gt_ref):
    x = x_ref[...]
    add_ref[...] = x + 5.0
    sub_ref[...] = x - 3.0
    mul_ref[...] = x * 2.0
    div_ref[...] = x * 0.25          # constant power-of-two divisor -> multiply
    gt_ref[...] = x > 2.0            # stored directly as 1-byte bool


def _pick_tile_rows(rows, max_tile_rows):
    """Row-tile size. Full array when it fits; otherwise a fixed tile whose
    row count is a multiple of 32 (legal for f32/bf16 and the 1-byte bool
    output); the ragged last block is handled by a cdiv grid."""
    if rows <= max_tile_rows:
        return rows                              # single full-array block
    return max(32, (max_tile_rows // 32) * 32)


def pt_module_forward(x, *, max_tile_rows=1024):
    """Reproduces PtModule.forward: (x+5, x-3, x*2, x/4, x>2)."""
    orig_shape = x.shape
    total = x.size

    # Flatten to (rows, 128); pad the tail if element count isn't lane-divisible.
    rows = pl.cdiv(total, LANES)
    pad = rows * LANES - total
    x_flat = x.reshape(-1)
    if pad:
        x_flat = jnp.pad(x_flat, (0, pad))
    x2d = x_flat.reshape(rows, LANES)

    tm = _pick_tile_rows(rows, max_tile_rows)
    grid = (pl.cdiv(rows, tm),)
    fspec = pl.BlockSpec((tm, LANES), lambda i: (i, 0))

    # Right-sized VMEM request: (1 in + 4 f32 out + 1 bool out) x 2 buffers,
    # plus a little headroom. Stays far below v7x's 64 MiB per-TC VMEM.
    itemsize = jnp.dtype(x.dtype).itemsize
    tile_val_bytes = tm * LANES * itemsize
    tile_mask_bytes = tm * LANES * 1
    vmem_needed = 2 * (5 * tile_val_bytes + tile_mask_bytes)
    vmem_limit = min(vmem_needed + (2 << 20), 32 << 20)

    out_shapes = (
        jax.ShapeDtypeStruct((rows, LANES), x.dtype),   # add
        jax.ShapeDtypeStruct((rows, LANES), x.dtype),   # sub
        jax.ShapeDtypeStruct((rows, LANES), x.dtype),   # mul
        jax.ShapeDtypeStruct((rows, LANES), x.dtype),   # div
        jax.ShapeDtypeStruct((rows, LANES), jnp.bool_), # gt mask (1 byte)
    )

    add2d, sub2d, mul2d, div2d, gt2d = pl.pallas_call(
        _elementwise_kernel,
        out_shape=out_shapes,
        grid=grid,
        in_specs=[fspec],
        out_specs=(fspec, fspec, fspec, fspec, fspec),
        compiler_params=pltpu.CompilerParams(
            dimension_semantics=("parallel",),   # independent tiles -> split across TCs on v7x
            vmem_limit_bytes=vmem_limit,
        ),
    )(x2d)

    def _to_orig(a2d):
        flat = a2d.reshape(-1)
        if pad:
            flat = flat[:total]
        return flat.reshape(orig_shape)

    return (
        _to_orig(add2d),
        _to_orig(sub2d),
        _to_orig(mul2d),
        _to_orig(div2d),
        _to_orig(gt2d),
    )


if __name__ == "__main__":
    key = jax.random.PRNGKey(0)
    x = jax.random.normal(key, (2, 4, 16, 16), dtype=jnp.float32) * 3.0

    outs = pt_module_forward(x)
    outs = jax.block_until_ready(outs)

    add_r, sub_r, mul_r, div_r, gt_r = outs
    # correctness check against plain JAX reference
    assert jnp.allclose(add_r, x + 5)
    assert jnp.allclose(sub_r, x - 3)
    assert jnp.allclose(mul_r, x * 2)
    assert jnp.allclose(div_r, x / 4)
    assert jnp.array_equal(gt_r, x > 2)
    assert gt_r.dtype == jnp.bool_

    print("KERNEL_OK")
</pallas_src>

<mosaic_0001>
module attributes {stable_mosaic.version = 11 : i64} {
  func.func @_elementwise_kernel(%arg0: i32, %arg1: memref<16x128xf32, #tpu.memory_space<vmem>>, %arg2: memref<16x128xf32, #tpu.memory_space<vmem>>, %arg3: memref<16x128xf32, #tpu.memory_space<vmem>>, %arg4: memref<16x128xf32, #tpu.memory_space<vmem>>, %arg5: memref<16x128xf32, #tpu.memory_space<vmem>>, %arg6: memref<16x128xi32, #tpu.memory_space<vmem>>) attributes {dimension_semantics = [#tpu.dimension_semantics<parallel>], iteration_bounds = array<i64: 1>, scalar_prefetch = 0 : i64, scratch_operands = 0 : i64, tpu.core_type = #tpu.core_type<tc>, window_params = [{transform_indices = @transform_0, window_bounds = array<i64: 16, 128>}, {transform_indices = @transform_1, window_bounds = array<i64: 16, 128>}, {transform_indices = @transform_2, window_bounds = array<i64: 16, 128>}, {transform_indices = @transform_3, window_bounds = array<i64: 16, 128>}, {transform_indices = @transform_4, window_bounds = array<i64: 16, 128>}, {transform_indices = @transform_5, window_bounds = array<i64: 16, 128>}]} {
    %c0 = arith.constant 0 : index
    %c0_0 = arith.constant 0 : index
    %0 = vector.load %arg1[%c0, %c0_0] : memref<16x128xf32, #tpu.memory_space<vmem>>, vector<16x128xf32>
    %cst = arith.constant 5.000000e+00 : f32
    %1 = vector.broadcast %cst : f32 to vector<16x128xf32>
    %2 = arith.addf %0, %1 : vector<16x128xf32>
    %c0_1 = arith.constant 0 : index
    %c0_2 = arith.constant 0 : index
    %3 = vector.load %arg2[%c0_1, %c0_2] : memref<16x128xf32, #tpu.memory_space<vmem>>, vector<16x128xf32>
    tpu.vector_store %arg2[%c0_1, %c0_2], %2 {strides = array<i32>} : memref<16x128xf32, #tpu.memory_space<vmem>>, vector<16x128xf32>,
    %cst_3 = arith.constant 3.000000e+00 : f32
    %4 = vector.broadcast %cst_3 : f32 to vector<16x128xf32>
    %5 = arith.subf %0, %4 : vector<16x128xf32>
    %c0_4 = arith.constant 0 : index
    %c0_5 = arith.constant 0 : index
    %6 = vector.load %arg3[%c0_4, %c0_5] : memref<16x128xf32, #tpu.memory_space<vmem>>, vector<16x128xf32>
    tpu.vector_store %arg3[%c0_4, %c0_5], %5 {strides = array<i32>} : memref<16x128xf32, #tpu.memory_space<vmem>>, vector<16x128xf32>,
    %cst_6 = arith.constant 2.000000e+00 : f32
    %7 = vector.broadcast %cst_6 : f32 to vector<16x128xf32>
    %8 = arith.mulf %0, %7 : vector<16x128xf32>
    %c0_7 = arith.constant 0 : index
    %c0_8 = arith.constant 0 : index
    %9 = vector.load %arg4[%c0_7, %c0_8] : memref<16x128xf32, #tpu.memory_space<vmem>>, vector<16x128xf32>
    tpu.vector_store %arg4[%c0_7, %c0_8], %8 {strides = array<i32>} : memref<16x128xf32, #tpu.memory_space<vmem>>, vector<16x128xf32>,
    %cst_9 = arith.constant 2.500000e-01 : f32
    %10 = vector.broadcast %cst_9 : f32 to vector<16x128xf32>
    %11 = arith.mulf %0, %10 : vector<16x128xf32>
    %c0_10 = arith.constant 0 : index
    %c0_11 = arith.constant 0 : index
    %12 = vector.load %arg5[%c0_10, %c0_11] : memref<16x128xf32, #tpu.memory_space<vmem>>, vector<16x128xf32>
    tpu.vector_store %arg5[%c0_10, %c0_11], %11 {strides = array<i32>} : memref<16x128xf32, #tpu.memory_space<vmem>>, vector<16x128xf32>,
    %cst_12 = arith.constant 2.000000e+00 : f32
    %13 = vector.broadcast %cst_12 : f32 to vector<16x128xf32>
    %14 = arith.cmpf ogt, %0, %13 : vector<16x128xf32>
    %c0_13 = arith.constant 0 : index
    %c0_14 = arith.constant 0 : index
    %15 = vector.load %arg6[%c0_13, %c0_14] : memref<16x128xi32, #tpu.memory_space<vmem>>, vector<16x128xi32>
    %16 = arith.extui %14 : vector<16x128xi1> to vector<16x128xi32>
    %cst_15 = arith.constant dense<0> : vector<16x128xi32>
    %17 = arith.cmpi ne, %15, %cst_15 : vector<16x128xi32>
    tpu.vector_store %arg6[%c0_13, %c0_14], %16 {strides = array<i32>} : memref<16x128xi32, #tpu.memory_space<vmem>>, vector<16x128xi32>,
    return
  }
  func.func @transform_0(%arg0: i32) -> (i32, i32) {
    %c0_i32 = arith.constant 0 : i32
    %c0_i32_0 = arith.constant 0 : i32
    return %arg0, %c0_i32 : i32, i32
  }
  func.func @transform_1(%arg0: i32) -> (i32, i32) {
    %c0_i32 = arith.constant 0 : i32
    %c0_i32_0 = arith.constant 0 : i32
    return %arg0, %c0_i32 : i32, i32
  }
  func.func @transform_2(%arg0: i32) -> (i32, i32) {
    %c0_i32 = arith.constant 0 : i32
    %c0_i32_0 = arith.constant 0 : i32
    return %arg0, %c0_i32 : i32, i32
  }
  func.func @transform_3(%arg0: i32) -> (i32, i32) {
    %c0_i32 = arith.constant 0 : i32
    %c0_i32_0 = arith.constant 0 : i32
    return %arg0, %c0_i32 : i32, i32
  }
  func.func @transform_4(%arg0: i32) -> (i32, i32) {
    %c0_i32 = arith.constant 0 : i32
    %c0_i32_0 = arith.constant 0 : i32
    return %arg0, %c0_i32 : i32, i32
  }
  func.func @transform_5(%arg0: i32) -> (i32, i32) {
    %c0_i32 = arith.constant 0 : i32
    %c0_i32_0 = arith.constant 0 : i32
    return %arg0, %c0_i32 : i32, i32
  }
}

</mosaic_0001>

<llo_original>
// kernel: tpu_custom_call.1
$region0: #{tpu_custom_call.1}
  #allocation0 [shape = 'u32[]', space=smem, size = 0x4, offset = 0x4, fixed_abs, tag = 'smem constant byte address 0x4 - core index']
  #allocation1 [shape = 'u32[144,128]{1,0:T(1,128)}', space=vmem, size = 0x12000, scoped, tag = 'internal scratch']
  %s0 = inlined_call_operand.hbm [shape: f32[16,128], index: 0, kind: input, shape index: {}]
  %s1 = inlined_call_operand.hbm [shape: f32[16,128], index: 1, kind: output, shape index: {0}]
  %s2 = inlined_call_operand.hbm [shape: f32[16,128], index: 2, kind: output, shape index: {1}]
  %s3 = inlined_call_operand.hbm [shape: f32[16,128], index: 3, kind: output, shape index: {2}]
  %s4 = inlined_call_operand.hbm [shape: f32[16,128], index: 4, kind: output, shape index: {3}]
  %s5 = inlined_call_operand.vmem [shape: s32[16,128], index: 5, kind: output, shape index: {4}]
  %6 = xla_tuple %s1, %s2, %s3, %s4, %s5
  %s7 = sld [smem:[#allocation0]]
  $region50: #{tpu_custom_call.1} parent=0
    _
  %s9 = ssub.s32 1, %s7
  %s10 = scalar_select 0, %s9, %s7
  $region1: #{tpu_custom_call.1} parent=0
    #allocation2 [shape = 'u8[8192]{0}', space=vmem, size = 0x2000, scoped, tag = 'input window, operand 0, single buffered']
    #allocation3 [shape = 's32[1]{0}', space=sflag, size = 0x4, scoped, tag = 'scoped memory for tpu_custom_call.1']
    #allocation4 [shape = 's32[1]{0}', space=sflag, size = 0x4, scoped, tag = 'scoped memory for tpu_custom_call.1']
    #allocation5 [shape = 'u8[8192]{0}', space=vmem, size = 0x2000, scoped, tag = 'output window, operand 0, single buffered']
    #allocation6 [shape = 'u8[8192]{0}', space=vmem, size = 0x2000, scoped, tag = 'output window, operand 1, single buffered']
    #allocation7 [shape = 's32[1]{0}', space=sflag, size = 0x4, scoped, tag = 'scoped memory for tpu_custom_call.1']
    #allocation8 [shape = 'u8[8192]{0}', space=vmem, size = 0x2000, scoped, tag = 'output window, operand 2, single buffered']
    #allocation9 [shape = 'u8[8192]{0}', space=vmem, size = 0x2000, scoped, tag = 'output window, operand 3, single buffered']
    #allocation10 [shape = 's32[1]{0}', space=sflag, size = 0x4, scoped, tag = 'scoped memory for tpu_custom_call.1']
    %11 = vsyncpa [#allocation3], 0
    %12 = vsyncpa [#allocation4], 0
    %13 = vsyncpa [#allocation7], 0
    %14 = vsyncpa [#allocation10], 0
    // Predicated region
    $region2: #{tpu_custom_call.1} parent=1 // pred_check
      _
    $region3: #{tpu_custom_call.1} parent=1 // pred_check_branch
      %16 = sbr.rel (0) target = $region5
    $region4: #{tpu_custom_call.1} parent=1 // pred_region
      %s18 = ssub.s32 256, 256
      %19 = vsyncadd [#allocation3], %s18
      %s20 = sshll.u32 [#allocation2], 4
      %s21 = int_to_ptr.vmem [resolvable:$true] %s20
      %26 = dma.hbm_to_vmem [thread:$0]  %s0, 256, %s21, [#allocation3], 128, 128, 8
    $region5: #{tpu_custom_call.1} parent=1 // pred_fallthru
      _
    // Predicated region
    $region6: #{tpu_custom_call.1} parent=1 // pred_check
      _
    $region7: #{tpu_custom_call.1} parent=1 // pred_check_branch
      %28 = sbr.rel (0) target = $region9
    $region8: #{tpu_custom_call.1} parent=1 // pred_region
      %29 = dma.done [#allocation3], 256
    $region9: #{tpu_custom_call.1} parent=1 // pred_fallthru
      _
    %v30 = vld [vmem:[#allocation2] sm:$0xff]
    %v31 = vld [vmem:[#allocation2 + $0x8] sm:$0xff]
    %v32 = vadd.f32 %v30, 5.0
    %v33 = vadd.f32 %v31, 5.0
    %34 = vst [vmem:[#allocation5] sm:$0xff] %v32
    %35 = vst [vmem:[#allocation5 + $0x8] sm:$0xff] %v33
    %v36 = vsub.f32 %v30, 3.0
    %v37 = vsub.f32 %v31, 3.0
    %38 = vst [vmem:[#allocation6] sm:$0xff] %v36
    %39 = vst [vmem:[#allocation6 + $0x8] sm:$0xff] %v37
    %v40 = vmul.f32 %v30, 2.0
    %v41 = vmul.f32 %v31, 2.0
    %42 = vst [vmem:[#allocation8] sm:$0xff] %v40
    %43 = vst [vmem:[#allocation8 + $0x8] sm:$0xff] %v41
    %v44 = vmul.f32 %v30, 0.25
    %v45 = vmul.f32 %v31, 0.25
    %46 = vst [vmem:[#allocation9] sm:$0xff] %v44
    %47 = vst [vmem:[#allocation9 + $0x8] sm:$0xff] %v45
    %vm48 = vcmp.gt.f32.partialorder %v30, 2.0
    %vm49 = vcmp.gt.f32.partialorder %v31, 2.0
    %v50 = vsel %vm48, 1, 0
    %v51 = vsel %vm49, 1, 0
    %52 = vst [vmem:[%s5] sm:$0xff] %v50
    %53 = vst [vmem:[%s5 + $0x8] sm:$0xff] %v51
    // Predicated region
    $region10: #{tpu_custom_call.1} parent=1 // pred_check
      _
    $region11: #{tpu_custom_call.1} parent=1 // pred_check_branch
      %55 = sbr.rel (0) target = $region13
    $region12: #{tpu_custom_call.1} parent=1 // pred_region
      %s57 = ssub.s32 256, 256
      %58 = vsyncadd [#allocation4], %s57
      %s59 = sshll.u32 [#allocation5], 4
      %s60 = int_to_ptr.vmem [resolvable:$true] %s59
      %65 = dma.vmem_to_hbm [thread:$0]  %s60, 256, %s1, [#allocation4], 128, 128, 8
    $region13: #{tpu_custom_call.1} parent=1 // pred_fallthru
      _
    // Predicated region
    $region14: #{tpu_custom_call.1} parent=1 // pred_check
      _
    $region15: #{tpu_custom_call.1} parent=1 // pred_check_branch
      %67 = sbr.rel (0) target = $region17
    $region16: #{tpu_custom_call.1} parent=1 // pred_region
      %s69 = ssub.s32 256, 256
      %70 = vsyncadd [#allocation7], %s69
      %s71 = sshll.u32 [#allocation6], 4
      %s72 = int_to_ptr.vmem [resolvable:$true] %s71
      %77 = dma.vmem_to_hbm [thread:$0]  %s72, 256, %s2, [#allocation7], 128, 128, 8
    $region17: #{tpu_custom_call.1} parent=1 // pred_fallthru
      _
    // Predicated region
    $region18: #{tpu_custom_call.1} parent=1 // pred_check
      _
    $region19: #{tpu_custom_call.1} parent=1 // pred_check_branch
      %79 = sbr.rel (0) target = $region21
    $region20: #{tpu_custom_call.1} parent=1 // pred_region
      %s81 = ssub.s32 256, 256
      %82 = vsyncadd [#allocation7], %s81
      %s83 = sshll.u32 [#allocation8], 4
      %s84 = int_to_ptr.vmem [resolvable:$true] %s83
      %89 = dma.vmem_to_hbm [thread:$0]  %s84, 256, %s3, [#allocation7], 128, 128, 8
    $region21: #{tpu_custom_call.1} parent=1 // pred_fallthru
      _
    // Predicated region
    $region22: #{tpu_custom_call.1} parent=1 // pred_check
      _
    $region23: #{tpu_custom_call.1} parent=1 // pred_check_branch
      %91 = sbr.rel (0) target = $region25
    $region24: #{tpu_custom_call.1} parent=1 // pred_region
      %s93 = ssub.s32 256, 256
      %94 = vsyncadd [#allocation10], %s93
      %s95 = sshll.u32 [#allocation9], 4
      %s96 = int_to_ptr.vmem [resolvable:$true] %s95
      %101 = dma.vmem_to_hbm [thread:$0]  %s96, 256, %s4, [#allocation10], 128, 128, 8
    $region25: #{tpu_custom_call.1} parent=1 // pred_fallthru
      _
    // Predicated region
    $region26: #{tpu_custom_call.1} parent=1 // pred_check
      _
    $region27: #{tpu_custom_call.1} parent=1 // pred_check_branch
      %103 = sbr.rel (0) target = $region29
    $region28: #{tpu_custom_call.1} parent=1 // pred_region
      _
    $region29: #{tpu_custom_call.1} parent=1 // pred_fallthru
      _
    // Predicated region
    $region30: #{tpu_custom_call.1} parent=1 // pred_check
      _
    $region31: #{tpu_custom_call.1} parent=1 // pred_check_branch
      %105 = sbr.rel (0) target = $region33
    $region32: #{tpu_custom_call.1} parent=1 // pred_region
      %106 = dma.done [#allocation4], 256
    $region33: #{tpu_custom_call.1} parent=1 // pred_fallthru
      _
    // Predicated region
    $region34: #{tpu_custom_call.1} parent=1 // pred_check
      _
    $region35: #{tpu_custom_call.1} parent=1 // pred_check_branch
      %108 = sbr.rel (0) target = $region37
    $region36: #{tpu_custom_call.1} parent=1 // pred_region
      %109 = dma.done [#allocation7], 256
    $region37: #{tpu_custom_call.1} parent=1 // pred_fallthru
      _
    // Predicated region
    $region38: #{tpu_custom_call.1} parent=1 // pred_check
      _
    $region39: #{tpu_custom_call.1} parent=1 // pred_check_branch
      %111 = sbr.rel (0) target = $region41
    $region40: #{tpu_custom_call.1} parent=1 // pred_region
      %112 = dma.done [#allocation7], 256
    $region41: #{tpu_custom_call.1} parent=1 // pred_fallthru
      _
    // Predicated region
    $region42: #{tpu_custom_call.1} parent=1 // pred_check
      _
    $region43: #{tpu_custom_call.1} parent=1 // pred_check_branch
      %114 = sbr.rel (0) target = $region45
    $region44: #{tpu_custom_call.1} parent=1 // pred_region
      %115 = dma.done [#allocation10], 256
    $region45: #{tpu_custom_call.1} parent=1 // pred_fallthru
      _
    // Predicated region
    $region46: #{tpu_custom_call.1} parent=1 // pred_check
      _
    $region47: #{tpu_custom_call.1} parent=1 // pred_check_branch
      %117 = sbr.rel (0) target = $region49
    $region48: #{tpu_custom_call.1} parent=1 // pred_region
      _
    $region49: #{tpu_custom_call.1} parent=1 // pred_fallthru
      _
    %118 = vsyncpa [#allocation3], 1
    %119 = vsyncpa [#allocation4], 1
    %120 = vsyncpa [#allocation7], 1
    %121 = vsyncpa [#allocation10], 1

</llo_original>
